<compile_context>
chip_gen: v6e
topology: v6e:2x2x1
jax: 0.10.0
libtpu: 0.0.40
codegen_flags: <defaults>
</compile_context>

<pallas_src>
import functools

import jax
import jax.numpy as jnp
from jax import lax
from jax.experimental import pallas as pl
from jax.experimental.pallas import tpu as pltpu


def _dsc_kernel(x_ref, wc_ref, o_ref, xpad_ref, *, K, r, We, HWe, PAD_L):
    """One image of the folded depthwise-separable conv.

    x_ref:    (C, HWe)     flattened, lane-dense image
    wc_ref:   (K*K, OC, C) folded weights wc[t,oc,c] = w_pw[oc,c] * w_dw[c,kh,kw]
    o_ref:    (OC, HWe)    flattened, lane-dense output
    xpad_ref: (C, TOT)     zero-padded staging buffer (VMEM scratch), TOT >= PAD_L+HWe
    """
    C = x_ref.shape[0]
    OC = o_ref.shape[0]
    TOT = xpad_ref.shape[1]

    # Zero only the pad regions (the interior is fully overwritten right after).
    # Scratch is per-core and the grid may be split across cores, so do it every step.
    if PAD_L > 0:
        xpad_ref[:, :PAD_L] = jnp.zeros((C, PAD_L), jnp.float32)
    if TOT > PAD_L + HWe:
        xpad_ref[:, PAD_L + HWe:] = jnp.zeros((C, TOT - PAD_L - HWe), jnp.float32)
    xpad_ref[:, PAD_L:PAD_L + HWe] = x_ref[...].astype(jnp.float32)

    # One column-wrap keep-mask per distinct horizontal offset dw != 0, hoisted out of
    # the kh loop so each iota/compare is materialized once.
    w_idx = lax.broadcasted_iota(jnp.int32, (1, HWe), 1) % We
    col_keep = {}
    for kw in range(K):
        dw = kw - r
        if dw > 0 and dw not in col_keep:
            col_keep[dw] = w_idx < We - dw
        elif dw < 0 and dw not in col_keep:
            col_keep[dw] = w_idx >= -dw

    acc = jnp.zeros((OC, HWe), jnp.float32)
    for kh in range(K):
        for kw in range(K):
            dh, dw = kh - r, kw - r
            off = dh * We + dw
            # Lane-dense shifted patch, (C, HWe). Row over/underflow reads zero pads;
            # only column wrap-around lanes need masking.
            patch = xpad_ref[:, PAD_L + off:PAD_L + off + HWe]
            if dw != 0:
                patch = jnp.where(col_keep[dw], patch, 0.0)
            # Folded tap weights -> one MXU matmul per tap, f32 accumulation.
            acc = acc + jnp.dot(wc_ref[kh * K + kw], patch,
                                preferred_element_type=jnp.float32)

    o_ref[...] = acc.astype(o_ref.dtype)


def depthwise_separable_conv(x, w_dw, w_pw, padding=0):
    """x: (N, C, H, W); w_dw: (C, K, K); w_pw: (OC, C). Returns (N, OC, Ho, Wo)."""
    N, C, H, W = x.shape
    OC = w_pw.shape[0]
    K = w_dw.shape[-1]
    Ho, Wo = H + 2 * padding - K + 1, W + 2 * padding - K + 1
    assert Ho > 0 and Wo > 0

    # The kernel absorbs up to (K-1)//2 of padding per side for free via its zero-padded
    # VMEM staging buffer; only the rare excess (2p > K-1) is materialized with jnp.pad.
    # For the usual "same" conv (2p == K-1) q == 0 -> no extra HBM pass.
    q = max(0, padding - (K - 1) // 2)
    r = padding - q
    if q > 0:
        x = jnp.pad(x, ((0, 0), (0, 0), (q, q), (q, q)))
    He, We = H + 2 * q, W + 2 * q
    HWe = He * We
    s = K - 1 - r
    pad_l = r * (We + 1)
    pad_l = ((pad_l + 127) // 128) * 128 if pad_l else 0   # lane-align staging store
    pad_r = s * (We + 1)
    tot = pad_l + HWe + pad_r
    tot = ((tot + 127) // 128) * 128                       # whole-lane scratch width

    # Lane-dense view: flatten spatial (free metadata reshape for contiguous NCHW).
    x_flat = x.reshape(N, C, HWe)

    # Fold depthwise into pointwise: wc[t, oc, c] = w_pw[oc, c] * w_dw[c, kh, kw],
    # with t = kh*K + kw.
    wc = (w_dw.transpose(1, 2, 0).reshape(K * K, 1, C)
          * w_pw[None, :, :]).astype(jnp.float32)

    kernel = functools.partial(_dsc_kernel, K=K, r=r, We=We, HWe=HWe, PAD_L=pad_l)

    # Explicit VMEM budget (BlockSpec double-buffers the blocks); generous headroom.
    block_bytes = 4 * (C * HWe + OC * HWe + K * K * OC * C + C * tot)
    vmem_limit = int(min(128 * 1024 * 1024, max(8 * 1024 * 1024, 8 * block_bytes)))

    cost = pl.CostEstimate(
        flops=2 * N * K * K * OC * C * HWe,
        transcendentals=0,
        bytes_accessed=4 * N * (C * HWe + OC * HWe) + 4 * K * K * OC * C,
    )

    # TODO(synk): for large C/H/W, additionally tile over output-row bands (with a K-1
    # halo) and channel blocks so blocks fit v7x's 64 MiB VMEM.
    out_flat = pl.pallas_call(
        kernel,
        out_shape=jax.ShapeDtypeStruct((N, OC, HWe), x.dtype),
        grid_spec=pltpu.PrefetchScalarGridSpec(
            num_scalar_prefetch=0,
            grid=(N,),
            in_specs=[
                pl.BlockSpec((pl.Squeezed(), C, HWe), lambda n: (n, 0, 0)),
                pl.BlockSpec((K * K, OC, C), lambda n: (0, 0, 0)),
            ],
            out_specs=pl.BlockSpec((pl.Squeezed(), OC, HWe), lambda n: (n, 0, 0)),
            scratch_shapes=[pltpu.VMEM((C, tot), jnp.float32)],
        ),
        compiler_params=pltpu.CompilerParams(
            dimension_semantics=("parallel",),
            vmem_limit_bytes=vmem_limit,
        ),
        cost_estimate=cost,
    )(x_flat, wc)

    out = out_flat.reshape(N, OC, He, We)
    if (He, We) != (Ho, Wo):
        out = out[:, :, :Ho, :Wo]   # crop for non-"same" configs (cheap slice)
    return out


def _reference(x, w_dw, w_pw, padding):
    """Plain-JAX reference matching PyTorch semantics."""
    C = x.shape[1]
    K = w_dw.shape[-1]
    dn = lax.conv_dimension_numbers(x.shape, (C, 1, K, K), ("NCHW", "OIHW", "NCHW"))
    dw = lax.conv_general_dilated(
        x, w_dw.reshape(C, 1, K, K),
        window_strides=(1, 1), padding=[(padding, padding)] * 2,
        dimension_numbers=dn, feature_group_count=C)
    OC = w_pw.shape[0]
    dn2 = lax.conv_dimension_numbers(dw.shape, (OC, C, 1, 1), ("NCHW", "OIHW", "NCHW"))
    return lax.conv_general_dilated(
        dw, w_pw.reshape(OC, C, 1, 1),
        window_strides=(1, 1), padding=[(0, 0)] * 2,
        dimension_numbers=dn2)


if __name__ == "__main__":
    # Small shapes consistent with the module: batch=2, in_channels=4, out_channels=8,
    # spatial=16x16, kernel_size=3, padding=1, bias=False.
    N, C, OC, H, W, K, P = 2, 4, 8, 16, 16, 3, 1

    key = jax.random.PRNGKey(0)
    kx, kd, kp = jax.random.split(key, 3)
    x = jax.random.normal(kx, (N, C, H, W), dtype=jnp.float32)
    # Deterministic parameter init (fan-in scaled normals; shapes per nn.Conv2d).
    w_dw = jax.random.normal(kd, (C, K, K), dtype=jnp.float32) / (K * K)
    w_pw = jax.random.normal(kp, (OC, C), dtype=jnp.float32) / C

    out = depthwise_separable_conv(x, w_dw, w_pw, P)
    out = jax.block_until_ready(out)

    ref = _reference(x, w_dw, w_pw, P)
    assert out.shape == (N, OC, H, W), out.shape
    err = float(jnp.max(jnp.abs(out - ref)))
    assert jnp.allclose(out, ref, atol=1e-4, rtol=1e-4), err

    print("KERNEL_OK")
</pallas_src>

<mosaic_0001>
module attributes {stable_mosaic.version = 11 : i64} {
  func.func @_dsc_kernel(%arg0: i32, %arg1: memref<1x4x256xf32, #tpu.memory_space<vmem>>, %arg2: memref<9x8x4xf32, #tpu.memory_space<vmem>>, %arg3: memref<1x8x256xf32, #tpu.memory_space<vmem>>, %arg4: memref<4x512xf32, #tpu.memory_space<vmem>>) attributes {dimension_semantics = [#tpu.dimension_semantics<parallel>], iteration_bounds = array<i64: 2>, scalar_prefetch = 0 : i64, scratch_operands = 1 : i64, tpu.core_type = #tpu.core_type<tc>, window_params = [{transform_indices = @transform_0, window_bounds = array<i64: 1, 4, 256>}, {pipeline_mode = #tpu.pipeline_mode<synchronous>, transform_indices = @transform_1, window_bounds = array<i64: 9, 8, 4>}, {transform_indices = @transform_2, window_bounds = array<i64: 1, 8, 256>}]} {
    %cst = arith.constant 0.000000e+00 : f32
    %0 = vector.broadcast %cst : f32 to vector<4x128xf32>
    %c0 = arith.constant 0 : index
    %c0_0 = arith.constant 0 : index
    %1 = vector.load %arg4[%c0, %c0_0] : memref<4x512xf32, #tpu.memory_space<vmem>>, vector<4x128xf32>
    tpu.vector_store %arg4[%c0, %c0_0], %0 {strides = array<i32>} : memref<4x512xf32, #tpu.memory_space<vmem>>, vector<4x128xf32>,
    %cst_1 = arith.constant 0.000000e+00 : f32
    %2 = vector.broadcast %cst_1 : f32 to vector<4x128xf32>
    %c0_2 = arith.constant 0 : index
    %c384 = arith.constant 384 : index
    %3 = vector.load %arg4[%c0_2, %c384] : memref<4x512xf32, #tpu.memory_space<vmem>>, vector<4x128xf32>
    tpu.vector_store %arg4[%c0_2, %c384], %2 {strides = array<i32>} : memref<4x512xf32, #tpu.memory_space<vmem>>, vector<4x128xf32>,
    %c0_3 = arith.constant 0 : index
    %c0_4 = arith.constant 0 : index
    %c0_5 = arith.constant 0 : index
    %4 = vector.load %arg1[%c0_3, %c0_4, %c0_5] : memref<1x4x256xf32, #tpu.memory_space<vmem>>, vector<1x4x256xf32>
    %5 = vector.shape_cast %4 : vector<1x4x256xf32> to vector<4x256xf32>
    %c0_6 = arith.constant 0 : index
    %c128 = arith.constant 128 : index
    %6 = vector.load %arg4[%c0_6, %c128] : memref<4x512xf32, #tpu.memory_space<vmem>>, vector<4x256xf32>
    tpu.vector_store %arg4[%c0_6, %c128], %5 {strides = array<i32>} : memref<4x512xf32, #tpu.memory_space<vmem>>, vector<4x256xf32>,
    %7 = tpu.iota {dimensions = array<i32: 1>} : vector<1x256xi32>
    %c16_i32 = arith.constant 16 : i32
    %c0_i32 = arith.constant 0 : i32
    %8 = arith.cmpi eq, %c16_i32, %c0_i32 : i32
    %c1_i32 = arith.constant 1 : i32
    %9 = arith.select %8, %c1_i32, %c16_i32 : i32
    %10 = vector.broadcast %9 : i32 to vector<1x256xi32>
    %11 = arith.remsi %7, %10 : vector<1x256xi32>
    %c0_i32_7 = arith.constant 0 : i32
    %12 = vector.broadcast %c0_i32_7 : i32 to vector<1x256xi32>
    %13 = arith.cmpi ne, %11, %12 : vector<1x256xi32>
    %c0_i32_8 = arith.constant 0 : i32
    %14 = vector.broadcast %c0_i32_8 : i32 to vector<1x256xi32>
    %15 = arith.cmpi slt, %11, %14 : vector<1x256xi32>
    %c0_i32_9 = arith.constant 0 : i32
    %16 = arith.cmpi slt, %9, %c0_i32_9 : i32
    %17 = vector.broadcast %16 : i1 to vector<1x256xi1>
    %18 = vector.broadcast %17 : vector<1x256xi1> to vector<1x256xi1>
    %19 = arith.xori %15, %18 : vector<1x256xi1>
    %20 = arith.andi %19, %13 : vector<1x256xi1>
    %21 = vector.broadcast %9 : i32 to vector<1x256xi32>
    %22 = arith.addi %11, %21 : vector<1x256xi32>
    %23 = arith.select %20, %22, %11 : vector<1x256xi1>, vector<1x256xi32>
    %c1_i32_10 = arith.constant 1 : i32
    %24 = vector.broadcast %c1_i32_10 : i32 to vector<1x256xi32>
    %25 = arith.cmpi sge, %23, %24 : vector<1x256xi32>
    %c15_i32 = arith.constant 15 : i32
    %26 = vector.broadcast %c15_i32 : i32 to vector<1x256xi32>
    %27 = arith.cmpi slt, %23, %26 : vector<1x256xi32>
    %cst_11 = arith.constant 0.000000e+00 : f32
    %28 = vector.broadcast %cst_11 : f32 to vector<8x256xf32>
    %c0_12 = arith.constant 0 : index
    %c111 = arith.constant 111 : index
    %29 = vector.load %arg4[%c0_12, %c111] : memref<4x512xf32, #tpu.memory_space<vmem>>, vector<4x256xf32>
    %cst_13 = arith.constant 0.000000e+00 : f32
    %30 = vector.shape_cast %25 : vector<1x256xi1> to vector<1x256xi1>
    %31 = vector.broadcast %30 : vector<1x256xi1> to vector<4x256xi1>
    %32 = vector.broadcast %cst_13 : f32 to vector<4x256xf32>
    %33 = arith.select %31, %29, %32 : vector<4x256xi1>, vector<4x256xf32>
    %c0_14 = arith.constant 0 : index
    %c0_15 = arith.constant 0 : index
    %c0_16 = arith.constant 0 : index
    %34 = vector.load %arg2[%c0_14, %c0_15, %c0_16] : memref<9x8x4xf32, #tpu.memory_space<vmem>>, vector<1x8x4xf32>
    %35 = vector.shape_cast %34 : vector<1x8x4xf32> to vector<8x4xf32>
    %cst_17 = arith.constant dense<0.000000e+00> : vector<8x256xf32>
    %36 = tpu.matmul %35, %33, %cst_17 {dimension_numbers = #tpu.dot_dimension_numbers<[1], [0], [0], [1], [0, 0, 1, 1], [], []>} : vector<8x4xf32>, vector<4x256xf32>, vector<8x256xf32> -> vector<8x256xf32>
    %37 = arith.addf %28, %36 : vector<8x256xf32>
    %c0_18 = arith.constant 0 : index
    %c112 = arith.constant 112 : index
    %38 = vector.load %arg4[%c0_18, %c112] : memref<4x512xf32, #tpu.memory_space<vmem>>, vector<4x256xf32>
    %c1 = arith.constant 1 : index
    %c0_19 = arith.constant 0 : index
    %c0_20 = arith.constant 0 : index
    %39 = vector.load %arg2[%c1, %c0_19, %c0_20] : memref<9x8x4xf32, #tpu.memory_space<vmem>>, vector<1x8x4xf32>
    %40 = vector.shape_cast %39 : vector<1x8x4xf32> to vector<8x4xf32>
    %cst_21 = arith.constant dense<0.000000e+00> : vector<8x256xf32>
    %41 = tpu.matmul %40, %38, %cst_21 {dimension_numbers = #tpu.dot_dimension_numbers<[1], [0], [0], [1], [0, 0, 1, 1], [], []>} : vector<8x4xf32>, vector<4x256xf32>, vector<8x256xf32> -> vector<8x256xf32>
    %42 = arith.addf %37, %41 : vector<8x256xf32>
    %c0_22 = arith.constant 0 : index
    %c113 = arith.constant 113 : index
    %43 = vector.load %arg4[%c0_22, %c113] : memref<4x512xf32, #tpu.memory_space<vmem>>, vector<4x256xf32>
    %cst_23 = arith.constant 0.000000e+00 : f32
    %44 = vector.shape_cast %27 : vector<1x256xi1> to vector<1x256xi1>
    %45 = vector.broadcast %44 : vector<1x256xi1> to vector<4x256xi1>
    %46 = vector.broadcast %cst_23 : f32 to vector<4x256xf32>
    %47 = arith.select %45, %43, %46 : vector<4x256xi1>, vector<4x256xf32>
    %c2 = arith.constant 2 : index
    %c0_24 = arith.constant 0 : index
    %c0_25 = arith.constant 0 : index
    %48 = vector.load %arg2[%c2, %c0_24, %c0_25] : memref<9x8x4xf32, #tpu.memory_space<vmem>>, vector<1x8x4xf32>
    %49 = vector.shape_cast %48 : vector<1x8x4xf32> to vector<8x4xf32>
    %cst_26 = arith.constant dense<0.000000e+00> : vector<8x256xf32>
    %50 = tpu.matmul %49, %47, %cst_26 {dimension_numbers = #tpu.dot_dimension_numbers<[1], [0], [0], [1], [0, 0, 1, 1], [], []>} : vector<8x4xf32>, vector<4x256xf32>, vector<8x256xf32> -> vector<8x256xf32>
    %51 = arith.addf %42, %50 : vector<8x256xf32>
    %c0_27 = arith.constant 0 : index
    %c127 = arith.constant 127 : index
    %52 = vector.load %arg4[%c0_27, %c127] : memref<4x512xf32, #tpu.memory_space<vmem>>, vector<4x256xf32>
    %cst_28 = arith.constant 0.000000e+00 : f32
    %53 = vector.shape_cast %25 : vector<1x256xi1> to vector<1x256xi1>
    %54 = vector.broadcast %53 : vector<1x256xi1> to vector<4x256xi1>
    %55 = vector.broadcast %cst_28 : f32 to vector<4x256xf32>
    %56 = arith.select %54, %52, %55 : vector<4x256xi1>, vector<4x256xf32>
    %c3 = arith.constant 3 : index
    %c0_29 = arith.constant 0 : index
    %c0_30 = arith.constant 0 : index
    %57 = vector.load %arg2[%c3, %c0_29, %c0_30] : memref<9x8x4xf32, #tpu.memory_space<vmem>>, vector<1x8x4xf32>
    %58 = vector.shape_cast %57 : vector<1x8x4xf32> to vector<8x4xf32>
    %cst_31 = arith.constant dense<0.000000e+00> : vector<8x256xf32>
    %59 = tpu.matmul %58, %56, %cst_31 {dimension_numbers = #tpu.dot_dimension_numbers<[1], [0], [0], [1], [0, 0, 1, 1], [], []>} : vector<8x4xf32>, vector<4x256xf32>, vector<8x256xf32> -> vector<8x256xf32>
    %60 = arith.addf %51, %59 : vector<8x256xf32>
    %c0_32 = arith.constant 0 : index
    %c128_33 = arith.constant 128 : index
    %61 = vector.load %arg4[%c0_32, %c128_33] : memref<4x512xf32, #tpu.memory_space<vmem>>, vector<4x256xf32>
    %c4 = arith.constant 4 : index
    %c0_34 = arith.constant 0 : index
    %c0_35 = arith.constant 0 : index
    %62 = vector.load %arg2[%c4, %c0_34, %c0_35] : memref<9x8x4xf32, #tpu.memory_space<vmem>>, vector<1x8x4xf32>
    %63 = vector.shape_cast %62 : vector<1x8x4xf32> to vector<8x4xf32>
    %cst_36 = arith.constant dense<0.000000e+00> : vector<8x256xf32>
    %64 = tpu.matmul %63, %61, %cst_36 {dimension_numbers = #tpu.dot_dimension_numbers<[1], [0], [0], [1], [0, 0, 1, 1], [], []>} : vector<8x4xf32>, vector<4x256xf32>, vector<8x256xf32> -> vector<8x256xf32>
    %65 = arith.addf %60, %64 : vector<8x256xf32>
    %c0_37 = arith.constant 0 : index
    %c129 = arith.constant 129 : index
    %66 = vector.load %arg4[%c0_37, %c129] : memref<4x512xf32, #tpu.memory_space<vmem>>, vector<4x256xf32>
    %cst_38 = arith.constant 0.000000e+00 : f32
    %67 = vector.shape_cast %27 : vector<1x256xi1> to vector<1x256xi1>
    %68 = vector.broadcast %67 : vector<1x256xi1> to vector<4x256xi1>
    %69 = vector.broadcast %cst_38 : f32 to vector<4x256xf32>
    %70 = arith.select %68, %66, %69 : vector<4x256xi1>, vector<4x256xf32>
    %c5 = arith.constant 5 : index
    %c0_39 = arith.constant 0 : index
    %c0_40 = arith.constant 0 : index
    %71 = vector.load %arg2[%c5, %c0_39, %c0_40] : memref<9x8x4xf32, #tpu.memory_space<vmem>>, vector<1x8x4xf32>
    %72 = vector.shape_cast %71 : vector<1x8x4xf32> to vector<8x4xf32>
    %cst_41 = arith.constant dense<0.000000e+00> : vector<8x256xf32>
    %73 = tpu.matmul %72, %70, %cst_41 {dimension_numbers = #tpu.dot_dimension_numbers<[1], [0], [0], [1], [0, 0, 1, 1], [], []>} : vector<8x4xf32>, vector<4x256xf32>, vector<8x256xf32> -> vector<8x256xf32>
    %74 = arith.addf %65, %73 : vector<8x256xf32>
    %c0_42 = arith.constant 0 : index
    %c143 = arith.constant 143 : index
    %75 = vector.load %arg4[%c0_42, %c143] : memref<4x512xf32, #tpu.memory_space<vmem>>, vector<4x256xf32>
    %cst_43 = arith.constant 0.000000e+00 : f32
    %76 = vector.shape_cast %25 : vector<1x256xi1> to vector<1x256xi1>
    %77 = vector.broadcast %76 : vector<1x256xi1> to vector<4x256xi1>
    %78 = vector.broadcast %cst_43 : f32 to vector<4x256xf32>
    %79 = arith.select %77, %75, %78 : vector<4x256xi1>, vector<4x256xf32>
    %c6 = arith.constant 6 : index
    %c0_44 = arith.constant 0 : index
    %c0_45 = arith.constant 0 : index
    %80 = vector.load %arg2[%c6, %c0_44, %c0_45] : memref<9x8x4xf32, #tpu.memory_space<vmem>>, vector<1x8x4xf32>
    %81 = vector.shape_cast %80 : vector<1x8x4xf32> to vector<8x4xf32>
    %cst_46 = arith.constant dense<0.000000e+00> : vector<8x256xf32>
    %82 = tpu.matmul %81, %79, %cst_46 {dimension_numbers = #tpu.dot_dimension_numbers<[1], [0], [0], [1], [0, 0, 1, 1], [], []>} : vector<8x4xf32>, vector<4x256xf32>, vector<8x256xf32> -> vector<8x256xf32>
    %83 = arith.addf %74, %82 : vector<8x256xf32>
    %c0_47 = arith.constant 0 : index
    %c144 = arith.constant 144 : index
    %84 = vector.load %arg4[%c0_47, %c144] : memref<4x512xf32, #tpu.memory_space<vmem>>, vector<4x256xf32>
    %c7 = arith.constant 7 : index
    %c0_48 = arith.constant 0 : index
    %c0_49 = arith.constant 0 : index
    %85 = vector.load %arg2[%c7, %c0_48, %c0_49] : memref<9x8x4xf32, #tpu.memory_space<vmem>>, vector<1x8x4xf32>
    %86 = vector.shape_cast %85 : vector<1x8x4xf32> to vector<8x4xf32>
    %cst_50 = arith.constant dense<0.000000e+00> : vector<8x256xf32>
    %87 = tpu.matmul %86, %84, %cst_50 {dimension_numbers = #tpu.dot_dimension_numbers<[1], [0], [0], [1], [0, 0, 1, 1], [], []>} : vector<8x4xf32>, vector<4x256xf32>, vector<8x256xf32> -> vector<8x256xf32>
    %88 = arith.addf %83, %87 : vector<8x256xf32>
    %c0_51 = arith.constant 0 : index
    %c145 = arith.constant 145 : index
    %89 = vector.load %arg4[%c0_51, %c145] : memref<4x512xf32, #tpu.memory_space<vmem>>, vector<4x256xf32>
    %cst_52 = arith.constant 0.000000e+00 : f32
    %90 = vector.shape_cast %27 : vector<1x256xi1> to vector<1x256xi1>
    %91 = vector.broadcast %90 : vector<1x256xi1> to vector<4x256xi1>
    %92 = vector.broadcast %cst_52 : f32 to vector<4x256xf32>
    %93 = arith.select %91, %89, %92 : vector<4x256xi1>, vector<4x256xf32>
    %c8 = arith.constant 8 : index
    %c0_53 = arith.constant 0 : index
    %c0_54 = arith.constant 0 : index
    %94 = vector.load %arg2[%c8, %c0_53, %c0_54] : memref<9x8x4xf32, #tpu.memory_space<vmem>>, vector<1x8x4xf32>
    %95 = vector.shape_cast %94 : vector<1x8x4xf32> to vector<8x4xf32>
    %cst_55 = arith.constant dense<0.000000e+00> : vector<8x256xf32>
    %96 = tpu.matmul %95, %93, %cst_55 {dimension_numbers = #tpu.dot_dimension_numbers<[1], [0], [0], [1], [0, 0, 1, 1], [], []>} : vector<8x4xf32>, vector<4x256xf32>, vector<8x256xf32> -> vector<8x256xf32>
    %97 = arith.addf %88, %96 : vector<8x256xf32>
    %c0_56 = arith.constant 0 : index
    %c0_57 = arith.constant 0 : index
    %c0_58 = arith.constant 0 : index
    %98 = vector.load %arg3[%c0_56, %c0_57, %c0_58] : memref<1x8x256xf32, #tpu.memory_space<vmem>>, vector<1x8x256xf32>
    %99 = vector.shape_cast %98 : vector<1x8x256xf32> to vector<8x256xf32>
    %100 = vector.shape_cast %97 : vector<8x256xf32> to vector<1x8x256xf32>
    tpu.vector_store %arg3[%c0_56, %c0_57, %c0_58], %100 {strides = array<i32>} : memref<1x8x256xf32, #tpu.memory_space<vmem>>, vector<1x8x256xf32>,
    return
  }
  func.func @transform_0(%arg0: i32) -> (i32, i32, i32) {
    %c0_i32 = arith.constant 0 : i32
    %c0_i32_0 = arith.constant 0 : i32
    %c0_i32_1 = arith.constant 0 : i32
    return %arg0, %c0_i32, %c0_i32_0 : i32, i32, i32
  }
  func.func @transform_1(%arg0: i32) -> (i32, i32, i32) {
    %c0_i32 = arith.constant 0 : i32
    %c0_i32_0 = arith.constant 0 : i32
    %c0_i32_1 = arith.constant 0 : i32
    %c0_i32_2 = arith.constant 0 : i32
    return %c0_i32, %c0_i32_0, %c0_i32_1 : i32, i32, i32
  }
  func.func @transform_2(%arg0: i32) -> (i32, i32, i32) {
    %c0_i32 = arith.constant 0 : i32
    %c0_i32_0 = arith.constant 0 : i32
    %c0_i32_1 = arith.constant 0 : i32
    return %arg0, %c0_i32, %c0_i32_0 : i32, i32, i32
  }
}

</mosaic_0001>

<llo_original>
// kernel: tpu_custom_call.1
$region0: #{tpu_custom_call.1}
  #allocation0 [shape = 'u32[]', space=smem, size = 0x4, offset = 0x4, fixed_abs, tag = 'smem constant byte address 0x4 - core index']
  #allocation1 [shape = 'u32[144,128]{1,0:T(1,128)}', space=vmem, size = 0x12000, scoped, tag = 'internal scratch']
  #allocation2 [shape = 'f32[4,512]{1,0:T(4,128)}', space=vmem, size = 0x2000, scoped, tag = 'scratch operand']
  %s0 = inlined_call_operand.vmem [shape: f32[2,4,256], index: 0, kind: input, shape index: {}]
  %s1 = inlined_call_operand.vmem [shape: f32[9,8,4], index: 1, kind: input, shape index: {}]
  %s2 = inlined_call_operand.hbm [shape: f32[2,8,256], index: 2, kind: output, shape index: {}]
  %s3 = sld [smem:[#allocation0]]
  $region41: #{tpu_custom_call.1} parent=0
    _
  %s5 = ssub.s32 1, %s3
  %s6 = scalar_select 0, %s5, %s3
  $region1: #{tpu_custom_call.1} parent=0
    #allocation3 [shape = 'u8[16384]{0}', space=vmem, size = 0x4000, scoped, tag = 'output window, operand 0']
    #allocation4 [shape = 's32[2]{0}', space=sflag, size = 0x8, scoped, tag = 'scoped memory for tpu_custom_call.1']
    %7 = vsyncpa [#allocation4], 0
    %s8 = scalar_lea.sflag [#allocation4], 1
    %9 = vsyncpa %s8, 0
    loop: start=0, step=1, limit=4
    $region2: #{tpu_custom_call.1} parent=1 // loop_pre_header
      _
    $region3: #{tpu_custom_call.1} parent=1 // loop_header
      %s11 = sphi 0, %s15
      %p12 = scmp.ge.s32.totalorder %s11, 4
      %s21 = sphi 0, %s23
      %s24 = sphi 0, %s21
      %s25 = sphi 0, %s24
      %s41 = sphi 0, %s25
      %s45 = sphi 0, %s45
      %s47 = sphi 0, %s45
      %s48 = sphi 0, %s47
      %s62 = sphi 0, %s48
      %s68 = sphi 0, %s70
      %s71 = sphi 0, %s68
      %s72 = sphi 0, %s71
      %s88 = sphi 0, %s72
    $region4: #{tpu_custom_call.1} parent=1 // loop_header_branch
      %14 = sbr.rel (%p12) target = $region8
    $region5: #{tpu_custom_call.1} parent=1 // loop_body
      %s16 = ssub.s32 %s11, 1
      %s17 = ssub.s32 %s11, 2
      %s18 = sadd.s32 %s11, 1
      %s19 = ssub.s32 %s11, %s18
      %p20 = scmp.eq.s32.totalorder %s19, 0
      %s22 = sadd.s32 %s21, 1
      %s23 = scalar_select %p20, %s21, %s22
      %p26 = pneg %p20
      %p27 = scmp.eq.s32.totalorder %s11, 1
      %p28 = por %p26, %p27
      %p29 = scmp.ne.s32.totalorder %s21, %s24
      %p30 = scmp.eq.s32.totalorder %s11, 0
      %p31 = por %p29, %p30
      %p32 = scmp.ne.s32.totalorder %s21, %s24
      %p33 = scmp.eq.s32.totalorder %s16, 1
      %p34 = por %p32, %p33
      %p35 = scmp.ne.s32.totalorder %s24, %s25
      %p36 = scmp.eq.s32.totalorder %s16, 0
      %p37 = por %p35, %p36
      %p38 = scmp.ne.s32.totalorder %s24, %s25
      %p39 = scmp.eq.s32.totalorder %s17, 1
      %p40 = por %p38, %p39
      %p42 = scmp.ne.s32.totalorder %s25, %s41
      %p43 = scmp.eq.s32.totalorder %s17, 0
      %p44 = por %p42, %p43
      %s46 = sadd.s32 %s45, 1
      %p49 = scmp.eq.s32.totalorder %s11, 1
      %p50 = scmp.ne.s32.totalorder %s45, %s47
      %p51 = scmp.eq.s32.totalorder %s11, 0
      %p52 = por %p50, %p51
      %p53 = scmp.ne.s32.totalorder %s45, %s47
      %p54 = scmp.eq.s32.totalorder %s16, 1
      %p55 = por %p53, %p54
      %p56 = scmp.ne.s32.totalorder %s47, %s48
      %p57 = scmp.eq.s32.totalorder %s16, 0
      %p58 = por %p56, %p57
      %p59 = scmp.ne.s32.totalorder %s47, %s48
      %p60 = scmp.eq.s32.totalorder %s17, 1
      %p61 = por %p59, %p60
      %p63 = scmp.ne.s32.totalorder %s48, %s62
      %p64 = scmp.eq.s32.totalorder %s17, 0
      %p65 = por %p63, %p64
      %s66 = ssub.s32 %s11, %s18
      %p67 = scmp.eq.s32.totalorder %s66, 0
      %s69 = sadd.s32 %s68, 1
      %s70 = scalar_select %p67, %s68, %s69
      %p73 = pneg %p67
      %p74 = scmp.eq.s32.totalorder %s11, 1
      %p75 = por %p73, %p74
      %p76 = scmp.ne.s32.totalorder %s68, %s71
      %p77 = scmp.eq.s32.totalorder %s11, 0
      %p78 = por %p76, %p77
      %p79 = scmp.ne.s32.totalorder %s68, %s71
      %p80 = scmp.eq.s32.totalorder %s16, 1
      %p81 = por %p79, %p80
      %p82 = scmp.ne.s32.totalorder %s71, %s72
      %p83 = scmp.eq.s32.totalorder %s16, 0
      %p84 = por %p82, %p83
      %p85 = scmp.ne.s32.totalorder %s71, %s72
      %p86 = scmp.eq.s32.totalorder %s17, 1
      %p87 = por %p85, %p86
      %p89 = scmp.ne.s32.totalorder %s72, %s88
      %p90 = scmp.eq.s32.totalorder %s17, 0
      %p91 = por %p89, %p90
      %p92 = scmp.le.s32.totalorder 1, %s11
      %p93 = scmp.lt.s32.totalorder %s11, 3
      %p94 = pnand %p92, %p93
      %p95 = pneg %p94
      // Predicated region
      $region9: #{tpu_custom_call.1} parent=5 // pred_check
        _
      $region10: #{tpu_custom_call.1} parent=5 // pred_check_branch
        %97 = sbr.rel (%p94) target = $region12
      $region11: #{tpu_custom_call.1} parent=5 // pred_region
        %s98 = ssub.s32 %s11, 1
        // Predicated region
        $region13: #{tpu_custom_call.1} parent=11 // pred_check
          %p99 = pneg %p58
        $region14: #{tpu_custom_call.1} parent=11 // pred_check_branch
          %101 = sbr.rel (%p99) target = $region16
        $region15: #{tpu_custom_call.1} parent=11 // pred_region
          _
        $region16: #{tpu_custom_call.1} parent=11 // pred_fallthru
          _
      $region12: #{tpu_custom_call.1} parent=5 // pred_fallthru
        _
      %p102 = scmp.lt.s32.totalorder %s11, 2
      // Predicated region
      $region17: #{tpu_custom_call.1} parent=5 // pred_check
        %p103 = pneg %p102
      $region18: #{tpu_custom_call.1} parent=5 // pred_check_branch
        %105 = sbr.rel (%p103) target = $region20
      $region19: #{tpu_custom_call.1} parent=5 // pred_region
        // Predicated region
        $region21: #{tpu_custom_call.1} parent=19 // pred_check
          %p106 = pneg %p31
        $region22: #{tpu_custom_call.1} parent=19 // pred_check_branch
          %108 = sbr.rel (%p106) target = $region24
        $region23: #{tpu_custom_call.1} parent=19 // pred_region
          %p109 = scmp.lt.s32.totalorder %s11, 1
          %s110 = scalar_select %p109, %s11, 1
          %s111 = smul.addr %s110, 2
          %s112 = smul.addr %s111, 4
          %s113 = scalar_lea.vmem %s0, %s112
        $region24: #{tpu_custom_call.1} parent=19 // pred_fallthru
          _
      $region20: #{tpu_custom_call.1} parent=5 // pred_fallthru
        _
      %p114 = scmp.le.s32.totalorder 1, %s11
      %p115 = scmp.lt.s32.totalorder %s11, 3
      %p116 = pnand %p114, %p115
      %p117 = pneg %p116
      // Predicated region
      $region25: #{tpu_custom_call.1} parent=5 // pred_check
        _
      $region26: #{tpu_custom_call.1} parent=5 // pred_check_branch
        %119 = sbr.rel (%p116) target = $region28
      $region27: #{tpu_custom_call.1} parent=5 // pred_region
        %s120 = ssub.s32 %s11, 1
        %p121 = scmp.lt.s32.totalorder %s16, 1
        %s122 = scalar_select %p121, %s16, 1
        %s123 = smul.addr %s122, 2
        %s124 = smul.addr %s123, 4
        %s125 = scalar_lea.vmem %s0, %s124
        %p126 = pneg %p37
        %p127 = pneg %p34
        %p128 = pneg %p58
        %p129 = pneg %p55
        %p130 = pneg %p84
        %p131 = pneg %p81
        %s132 = sand.u32 %s71, 1
        %s133 = scalar_lea.sflag [#allocation4], %s132
        %s134 = sand.u32 %s71, 1
        %s135 = smul.addr %s134, 16
        %s136 = scalar_lea.vmem [#allocation3], %s135
        %p137 = scmp.lt.s32.totalorder %s16, 1
        %s138 = scalar_select %p137, %s16, 1
        %s139 = smul.addr %s138, 2
        %s140 = smul.addr %s139, 4
        %s141 = scalar_lea.vmem %s0, %s140
        %142 = vst [vmem:[#allocation2] sm:$0xf] 0.0
        %143 = vst [vmem:[#allocation2 + $0xc] sm:$0xf] 0.0
        %v144 = vld [vmem:[%s141] sm:$0xff]
        %145 = vst [vmem:[#allocation2 + $0x4] sm:$0xff] %v144
        %v146 = vlaneseq
        %v147 = vand.u32 %v146, 127
        %v148 = vadd.s32 %v147, 128
        %vm149 = vcmp.lt.s32.totalorder %v147, 0
        %v150 = vsub.s32 0, %v147
        %v151 = vsel %vm149, %v150, %v147
        %v152 = vshrl.u32 %v151, 4
        %v153 = vand.u32 %v151, 15
        %v154 = vsub.s32 0, %v153
        %v155 = vsel %vm149, %v154, %v153
        %vm156 = vcmp.lt.s32.totalorder %v148, 0
        %v157 = vsub.s32 0, %v148
        %v158 = vsel %vm156, %v157, %v148
        %v159 = vshrl.u32 %v158, 4
        %v160 = vand.u32 %v158, 15
        %v161 = vsub.s32 0, %v160
        %v162 = vsel %vm156, %v161, %v160
        %vm163 = vcmp.ne.s32.totalorder %v155, 0
        %vm164 = vcmp.ne.s32.totalorder %v162, 0
        %vm165 = vcmp.lt.s32.totalorder %v155, 0
        %vm166 = vcmp.lt.s32.totalorder %v162, 0
        %vm167 = vmand %vm165, %vm163
        %vm168 = vmand %vm166, %vm164
        %v169 = vadd.s32 %v155, 16
        %v170 = vadd.s32 %v162, 16
        %v171 = vsel %vm167, %v169, %v155
        %v172 = vsel %vm168, %v170, %v162
        %vm173 = vcmp.ge.s32.totalorder %v171, 1
        %vm174 = vcmp.ge.s32.totalorder %v172, 1
        %vm175 = vcmp.lt.s32.totalorder %v171, 15
        %vm176 = vcmp.lt.s32.totalorder %v172, 15
        %v177 = vld [vmem:[#allocation2] sm:$0xff]
        %v178 = vld [vmem:[#allocation2 + $0x8] sm:$0xf]
        %v179 = vsel %vm173, 1, 0
        %v180 = vsel %vm174, 1, 0
        %vm181 = vcmp.eq.s32.totalorder %v179, 1
        %vm182 = vcmp.eq.s32.totalorder %v180, 1
        %v185 = vcombine.high %v177, %v177
        %186 = vrot.lane.b32.xlu0 %v177, 17
        %v187 = vpop.permute.xlu0 %186
        %188 = vrot.lane.b32.xlu0 %v185, 17
        %v189 = vpop.permute.xlu0 %188
        %190 = vrot.lane.b32.xlu0 %v178, 17
        %v191 = vpop.permute.xlu0 %190
        %vm192 = vcmask 138240
        %v193 = vsel %vm192, %v187, %v189
        %v194 = vsel %vm192, %v189, %v191
        %v197 = vsel %vm181, %v193, 0.0
        %v198 = vsel %vm182, %v194, 0.0
        %v199 = vld [vmem:[%s1] sm:$0xff]
        %s200 = scalar_lea.vmem %s1, 8
        %v201 = vld [vmem:[%s200] sm:$0xff]
        %202 = vrot.lane.b32.xlu0 %v177, 16
        %v203 = vpop.permute.xlu0 %202
        %204 = vrot.lane.b32.xlu0 %v185, 16
        %v205 = vpop.permute.xlu0 %204
        %206 = vrot.lane.b32.xlu0 %v178, 16
        %v207 = vpop.permute.xlu0 %206
        %vm208 = vcmask 130048
        %v209 = vsel %vm208, %v203, %v205
        %v210 = vsel %vm208, %v205, %v207
        %vm211 = vcmask 31744
        %v213 = vsel %vm211, %v201, 0
        %vm215 = vcmask 1043456
        %v216 = vsel %vm215, %v209, 0
        %v218 = vsel %vm215, %v210, 0
        %220 = vmatprep.subr.mxu0 0.0
        %221 = vmatpush1.msra.mxu0 0.0
        %222 = vmatprep.subr.mxu0 0.0
        %223 = vmatpush1.msra.mxu0 0.0
        %224 = vmatprep.subr.mxu0 0.0
        %225 = vmatpush1.msra.mxu0 0.0
        %226 = vmatprep.subr.mxu0 0.0
        %227 = vmatpush1.msra.mxu0 0.0
        %228 = vmatprep.subr.mxu0 0.0
        %229 = vmatpush1.msra.mxu0 0.0
        %230 = vmatprep.subr.mxu0 0.0
        %231 = vmatpush1.msra.mxu0 0.0
        %232 = vmatprep.subr.mxu0 0.0
        %233 = vmatpush1.msra.mxu0 0.0
        %234 = vmatprep.subr.mxu0 0.0
        %235 = vmatpush1.msra.mxu0 0.0
        %236 = vmatprep.subr.mxu0 0.0
        %237 = vmatpush1.msra.mxu0 0.0
        %238 = vmatprep.subr.mxu0 0.0
        %239 = vmatpush1.msra.mxu0 0.0
        %240 = vmatprep.subr.mxu0 0.0
        %241 = vmatpush1.msra.mxu0 0.0
        %242 = vmatprep.subr.mxu0 0.0
        %243 = vmatpush1.msra.mxu0 0.0
        %244 = vmatprep.subr.mxu0 0.0
        %245 = vmatpush1.msra.mxu0 0.0
        %246 = vmatprep.subr.mxu0 0.0
        %247 = vmatpush1.msra.mxu0 0.0
        %248 = vmatprep.subr.mxu0 0.0
        %249 = vmatpush1.msra.mxu0 0.0
        %250 = vmatprep.subr.mxu0 %v218
        %251 = vmatpush1.msra.mxu0 %v216
        %252 = vmatprep.subr.mxu0 0.0
        %253 = vmatpush2.msra.mxu0 0.0
        %254 = vmatprep.subr.mxu0 0.0
        %255 = vmatpush2.msra.mxu0 0.0
        %256 = vmatprep.subr.mxu0 0.0
        %257 = vmatpush2.msra.mxu0 0.0
        %258 = vmatprep.subr.mxu0 0.0
        %259 = vmatpush2.msra.mxu0 0.0
        %260 = vmatprep.subr.mxu0 0.0
        %261 = vmatpush2.msra.mxu0 0.0
        %262 = vmatprep.subr.mxu0 0.0
        %263 = vmatpush2.msra.mxu0 0.0
        %264 = vmatprep.subr.mxu0 0.0
        %265 = vmatpush2.msra.mxu0 0.0
        %266 = vmatprep.subr.mxu0 0.0
        %267 = vmatpush2.msra.mxu0 0.0
        %268 = vmatprep.subr.mxu0 0.0
        %269 = vmatpush2.msra.mxu0 0.0
        %270 = vmatprep.subr.mxu0 0.0
        %271 = vmatpush2.msra.mxu0 0.0
        %272 = vmatprep.subr.mxu0 0.0
        %273 = vmatpush2.msra.mxu0 0.0
        %274 = vmatprep.subr.mxu0 0.0
        %275 = vmatpush2.msra.mxu0 0.0
        %276 = vmatprep.subr.mxu0 0.0
        %277 = vmatpush2.msra.mxu0 0.0
        %278 = vmatprep.subr.mxu0 0.0
        %279 = vmatpush2.msra.mxu0 0.0
        %280 = vmatprep.subr.mxu0 0.0
        %281 = vmatpush2.msra.mxu0 0.0
        %282 = vmatprep.subr.mxu0 0.0
        %283 = vmatpush2.msra.mxu0 0.0
        %284 = vmatprep.mubr.f32.mxu0 0.0
        %285 = vmatmul.mubr.f32.gmra.mxu0 %v213
        %v286 = vpop.f32.mrf.mxu0
        %v287 = vadd.f32 0.0, %v286
        %v288 = vpop.f32.mrf.mxu0
        %v289 = vadd.f32 0.0, %v288
        %290 = vdwg.mxu0
        %v292 = vsel %vm211, %v199, 0
        %v295 = vsel %vm215, %v197, 0
        %v298 = vsel %vm215, %v198, 0
        %300 = vmatprep.subr.mxu0 0.0
        %301 = vmatpush1.msra.mxu0 0.0
        %302 = vmatprep.subr.mxu0 0.0
        %303 = vmatpush1.msra.mxu0 0.0
        %304 = vmatprep.subr.mxu0 0.0
        %305 = vmatpush1.msra.mxu0 0.0
        %306 = vmatprep.subr.mxu0 0.0
        %307 = vmatpush1.msra.mxu0 0.0
        %308 = vmatprep.subr.mxu0 0.0
        %309 = vmatpush1.msra.mxu0 0.0
        %310 = vmatprep.subr.mxu0 0.0
        %311 = vmatpush1.msra.mxu0 0.0
        %312 = vmatprep.subr.mxu0 0.0
        %313 = vmatpush1.msra.mxu0 0.0
        %314 = vmatprep.subr.mxu0 0.0
        %315 = vmatpush1.msra.mxu0 0.0
        %316 = vmatprep.subr.mxu0 0.0
        %317 = vmatpush1.msra.mxu0 0.0
        %318 = vmatprep.subr.mxu0 0.0
        %319 = vmatpush1.msra.mxu0 0.0
        %320 = vmatprep.subr.mxu0 0.0
        %321 = vmatpush1.msra.mxu0 0.0
        %322 = vmatprep.subr.mxu0 0.0
        %323 = vmatpush1.msra.mxu0 0.0
        %324 = vmatprep.subr.mxu0 0.0
        %325 = vmatpush1.msra.mxu0 0.0
        %326 = vmatprep.subr.mxu0 0.0
        %327 = vmatpush1.msra.mxu0 0.0
        %328 = vmatprep.subr.mxu0 0.0
        %329 = vmatpush1.msra.mxu0 0.0
        %330 = vmatprep.subr.mxu0 %v298
        %331 = vmatpush1.msra.mxu0 %v295
        %332 = vmatprep.subr.mxu0 0.0
        %333 = vmatpush2.msra.mxu0 0.0
        %334 = vmatprep.subr.mxu0 0.0
        %335 = vmatpush2.msra.mxu0 0.0
        %336 = vmatprep.subr.mxu0 0.0
        %337 = vmatpush2.msra.mxu0 0.0
        %338 = vmatprep.subr.mxu0 0.0
        %339 = vmatpush2.msra.mxu0 0.0
        %340 = vmatprep.subr.mxu0 0.0
        %341 = vmatpush2.msra.mxu0 0.0
        %342 = vmatprep.subr.mxu0 0.0
        %343 = vmatpush2.msra.mxu0 0.0
        %344 = vmatprep.subr.mxu0 0.0
        %345 = vmatpush2.msra.mxu0 0.0
        %346 = vmatprep.subr.mxu0 0.0
        %347 = vmatpush2.msra.mxu0 0.0
        %348 = vmatprep.subr.mxu0 0.0
        %349 = vmatpush2.msra.mxu0 0.0
        %350 = vmatprep.subr.mxu0 0.0
        %351 = vmatpush2.msra.mxu0 0.0
        %352 = vmatprep.subr.mxu0 0.0
        %353 = vmatpush2.msra.mxu0 0.0
        %354 = vmatprep.subr.mxu0 0.0
        %355 = vmatpush2.msra.mxu0 0.0
        %356 = vmatprep.subr.mxu0 0.0
        %357 = vmatpush2.msra.mxu0 0.0
        %358 = vmatprep.subr.mxu0 0.0
        %359 = vmatpush2.msra.mxu0 0.0
        %360 = vmatprep.subr.mxu0 0.0
        %361 = vmatpush2.msra.mxu0 0.0
        %362 = vmatprep.subr.mxu0 0.0
        %363 = vmatpush2.msra.mxu0 0.0
        %364 = vmatprep.mubr.f32.mxu0 0.0
        %365 = vmatmul.mubr.f32.gmra.mxu0 %v292
        %v366 = vpop.f32.mrf.mxu0
        %v367 = vadd.f32 %v287, %v366
        %v368 = vpop.f32.mrf.mxu0
        %v369 = vadd.f32 %v289, %v368
        %370 = vdwg.mxu0
        %v371 = vld [vmem:[#allocation2] sm:$0xff]
        %v372 = vld [vmem:[#allocation2 + $0x8] sm:$0xf]
        %v373 = vsel %vm175, 1, 0
        %v374 = vsel %vm176, 1, 0
        %vm375 = vcmp.eq.s32.totalorder %v373, 1
        %vm376 = vcmp.eq.s32.totalorder %v374, 1
        %v379 = vcombine.high %v371, %v371
        %380 = vrot.lane.b32.xlu0 %v371, 15
        %v381 = vpop.permute.xlu0 %380
        %382 = vrot.lane.b32.xlu0 %v379, 15
        %v383 = vpop.permute.xlu0 %382
        %384 = vrot.lane.b32.xlu0 %v372, 15
        %v385 = vpop.permute.xlu0 %384
        %vm386 = vcmask 121856
        %v387 = vsel %vm386, %v381, %v383
        %v388 = vsel %vm386, %v383, %v385
        %v391 = vsel %vm375, %v387, 0.0
        %v392 = vsel %vm376, %v388, 0.0
        %s393 = scalar_lea.vmem %s1, 16
        %v394 = vld [vmem:[%s393] sm:$0xff]
        %v396 = vsel %vm211, %v394, 0
        %v399 = vsel %vm215, %v391, 0
        %v402 = vsel %vm215, %v392, 0
        %404 = vmatprep.subr.mxu0 0.0
        %405 = vmatpush1.msra.mxu0 0.0
        %406 = vmatprep.subr.mxu0 0.0
        %407 = vmatpush1.msra.mxu0 0.0
        %408 = vmatprep.subr.mxu0 0.0
        %409 = vmatpush1.msra.mxu0 0.0
        %410 = vmatprep.subr.mxu0 0.0
        %411 = vmatpush1.msra.mxu0 0.0
        %412 = vmatprep.subr.mxu0 0.0
        %413 = vmatpush1.msra.mxu0 0.0
        %414 = vmatprep.subr.mxu0 0.0
        %415 = vmatpush1.msra.mxu0 0.0
        %416 = vmatprep.subr.mxu0 0.0
        %417 = vmatpush1.msra.mxu0 0.0
        %418 = vmatprep.subr.mxu0 0.0
        %419 = vmatpush1.msra.mxu0 0.0
        %420 = vmatprep.subr.mxu0 0.0
        %421 = vmatpush1.msra.mxu0 0.0
        %422 = vmatprep.subr.mxu0 0.0
        %423 = vmatpush1.msra.mxu0 0.0
        %424 = vmatprep.subr.mxu0 0.0
        %425 = vmatpush1.msra.mxu0 0.0
        %426 = vmatprep.subr.mxu0 0.0
        %427 = vmatpush1.msra.mxu0 0.0
        %428 = vmatprep.subr.mxu0 0.0
        %429 = vmatpush1.msra.mxu0 0.0
        %430 = vmatprep.subr.mxu0 0.0
        %431 = vmatpush1.msra.mxu0 0.0
        %432 = vmatprep.subr.mxu0 0.0
        %433 = vmatpush1.msra.mxu0 0.0
        %434 = vmatprep.subr.mxu0 %v402
        %435 = vmatpush1.msra.mxu0 %v399
        %436 = vmatprep.subr.mxu0 0.0
        %437 = vmatpush2.msra.mxu0 0.0
        %438 = vmatprep.subr.mxu0 0.0
        %439 = vmatpush2.msra.mxu0 0.0
        %440 = vmatprep.subr.mxu0 0.0
        %441 = vmatpush2.msra.mxu0 0.0
        %442 = vmatprep.subr.mxu0 0.0
        %443 = vmatpush2.msra.mxu0 0.0
        %444 = vmatprep.subr.mxu0 0.0
        %445 = vmatpush2.msra.mxu0 0.0
        %446 = vmatprep.subr.mxu0 0.0
        %447 = vmatpush2.msra.mxu0 0.0
        %448 = vmatprep.subr.mxu0 0.0
        %449 = vmatpush2.msra.mxu0 0.0
        %450 = vmatprep.subr.mxu0 0.0
        %451 = vmatpush2.msra.mxu0 0.0
        %452 = vmatprep.subr.mxu0 0.0
        %453 = vmatpush2.msra.mxu0 0.0
        %454 = vmatprep.subr.mxu0 0.0
        %455 = vmatpush2.msra.mxu0 0.0
        %456 = vmatprep.subr.mxu0 0.0
        %457 = vmatpush2.msra.mxu0 0.0
        %458 = vmatprep.subr.mxu0 0.0
        %459 = vmatpush2.msra.mxu0 0.0
        %460 = vmatprep.subr.mxu0 0.0
        %461 = vmatpush2.msra.mxu0 0.0
        %462 = vmatprep.subr.mxu0 0.0
        %463 = vmatpush2.msra.mxu0 0.0
        %464 = vmatprep.subr.mxu0 0.0
        %465 = vmatpush2.msra.mxu0 0.0
        %466 = vmatprep.subr.mxu0 0.0
        %467 = vmatpush2.msra.mxu0 0.0
        %468 = vmatprep.mubr.f32.mxu0 0.0
        %469 = vmatmul.mubr.f32.gmra.mxu0 %v396
        %v470 = vpop.f32.mrf.mxu0
        %v471 = vadd.f32 0.0, %v470
        %v472 = vpop.f32.mrf.mxu0
        %v473 = vadd.f32 0.0, %v472
        %474 = vdwg.mxu0
        %v475 = vadd.f32 %v367, %v471
        %v476 = vadd.f32 %v369, %v473
        %v477 = vld [vmem:[#allocation2] sm:$0xff]
        %v478 = vld [vmem:[#allocation2 + $0x8] sm:$0xf]
        %v481 = vcombine.high %v477, %v477
        %482 = vrot.lane.b32.xlu0 %v477, 1
        %v483 = vpop.permute.xlu0 %482
        %484 = vrot.lane.b32.xlu0 %v481, 1
        %v485 = vpop.permute.xlu0 %484
        %486 = vrot.lane.b32.xlu0 %v478, 1
        %v487 = vpop.permute.xlu0 %486
        %vm488 = vcmask 7168
        %v489 = vsel %vm488, %v483, %v485
        %v490 = vsel %vm488, %v485, %v487
        %v493 = vsel %vm181, %v489, 0.0
        %v494 = vsel %vm182, %v490, 0.0
        %s495 = scalar_lea.vmem %s1, 24
        %v496 = vld [vmem:[%s495] sm:$0xff]
        %v498 = vsel %vm211, %v496, 0
        %v501 = vsel %vm215, %v493, 0
        %v504 = vsel %vm215, %v494, 0
        %506 = vmatprep.subr.mxu0 0.0
        %507 = vmatpush1.msra.mxu0 0.0
        %508 = vmatprep.subr.mxu0 0.0
        %509 = vmatpush1.msra.mxu0 0.0
        %510 = vmatprep.subr.mxu0 0.0
        %511 = vmatpush1.msra.mxu0 0.0
        %512 = vmatprep.subr.mxu0 0.0
        %513 = vmatpush1.msra.mxu0 0.0
        %514 = vmatprep.subr.mxu0 0.0
        %515 = vmatpush1.msra.mxu0 0.0
        %516 = vmatprep.subr.mxu0 0.0
        %517 = vmatpush1.msra.mxu0 0.0
        %518 = vmatprep.subr.mxu0 0.0
        %519 = vmatpush1.msra.mxu0 0.0
        %520 = vmatprep.subr.mxu0 0.0
        %521 = vmatpush1.msra.mxu0 0.0
        %522 = vmatprep.subr.mxu0 0.0
        %523 = vmatpush1.msra.mxu0 0.0
        %524 = vmatprep.subr.mxu0 0.0
        %525 = vmatpush1.msra.mxu0 0.0
        %526 = vmatprep.subr.mxu0 0.0
        %527 = vmatpush1.msra.mxu0 0.0
        %528 = vmatprep.subr.mxu0 0.0
        %529 = vmatpush1.msra.mxu0 0.0
        %530 = vmatprep.subr.mxu0 0.0
        %531 = vmatpush1.msra.mxu0 0.0
        %532 = vmatprep.subr.mxu0 0.0
        %533 = vmatpush1.msra.mxu0 0.0
        %534 = vmatprep.subr.mxu0 0.0
        %535 = vmatpush1.msra.mxu0 0.0
        %536 = vmatprep.subr.mxu0 %v504
        %537 = vmatpush1.msra.mxu0 %v501
        %538 = vmatprep.subr.mxu0 0.0
        %539 = vmatpush2.msra.mxu0 0.0
        %540 = vmatprep.subr.mxu0 0.0
        %541 = vmatpush2.msra.mxu0 0.0
        %542 = vmatprep.subr.mxu0 0.0
        %543 = vmatpush2.msra.mxu0 0.0
        %544 = vmatprep.subr.mxu0 0.0
        %545 = vmatpush2.msra.mxu0 0.0
        %546 = vmatprep.subr.mxu0 0.0
        %547 = vmatpush2.msra.mxu0 0.0
        %548 = vmatprep.subr.mxu0 0.0
        %549 = vmatpush2.msra.mxu0 0.0
        %550 = vmatprep.subr.mxu0 0.0
        %551 = vmatpush2.msra.mxu0 0.0
        %552 = vmatprep.subr.mxu0 0.0
        %553 = vmatpush2.msra.mxu0 0.0
        %554 = vmatprep.subr.mxu0 0.0
        %555 = vmatpush2.msra.mxu0 0.0
        %556 = vmatprep.subr.mxu0 0.0
        %557 = vmatpush2.msra.mxu0 0.0
        %558 = vmatprep.subr.mxu0 0.0
        %559 = vmatpush2.msra.mxu0 0.0
        %560 = vmatprep.subr.mxu0 0.0
        %561 = vmatpush2.msra.mxu0 0.0
        %562 = vmatprep.subr.mxu0 0.0
        %563 = vmatpush2.msra.mxu0 0.0
        %564 = vmatprep.subr.mxu0 0.0
        %565 = vmatpush2.msra.mxu0 0.0
        %566 = vmatprep.subr.mxu0 0.0
        %567 = vmatpush2.msra.mxu0 0.0
        %568 = vmatprep.subr.mxu0 0.0
        %569 = vmatpush2.msra.mxu0 0.0
        %570 = vmatprep.mubr.f32.mxu0 0.0
        %571 = vmatmul.mubr.f32.gmra.mxu0 %v498
        %v572 = vpop.f32.mrf.mxu0
        %v573 = vadd.f32 0.0, %v572
        %v574 = vpop.f32.mrf.mxu0
        %v575 = vadd.f32 0.0, %v574
        %576 = vdwg.mxu0
        %v577 = vadd.f32 %v475, %v573
        %v578 = vadd.f32 %v476, %v575
        %v579 = vld [vmem:[#allocation2 + $0x4] sm:$0xff]
        %s580 = scalar_lea.vmem %s1, 32
        %v581 = vld [vmem:[%s580] sm:$0xff]
        %v583 = vcombine.high %v579, %v579
        %v585 = vsel %vm211, %v581, 0
        %v587 = vsel %vm215, %v579, 0
        %v589 = vsel %vm215, %v583, 0
        %591 = vmatprep.subr.mxu0 0.0
        %592 = vmatpush1.msra.mxu0 0.0
        %593 = vmatprep.subr.mxu0 0.0
        %594 = vmatpush1.msra.mxu0 0.0
        %595 = vmatprep.subr.mxu0 0.0
        %596 = vmatpush1.msra.mxu0 0.0
        %597 = vmatprep.subr.mxu0 0.0
        %598 = vmatpush1.msra.mxu0 0.0
        %599 = vmatprep.subr.mxu0 0.0
        %600 = vmatpush1.msra.mxu0 0.0
        %601 = vmatprep.subr.mxu0 0.0
        %602 = vmatpush1.msra.mxu0 0.0
        %603 = vmatprep.subr.mxu0 0.0
        %604 = vmatpush1.msra.mxu0 0.0
        %605 = vmatprep.subr.mxu0 0.0
        %606 = vmatpush1.msra.mxu0 0.0
        %607 = vmatprep.subr.mxu0 0.0
        %608 = vmatpush1.msra.mxu0 0.0
        %609 = vmatprep.subr.mxu0 0.0
        %610 = vmatpush1.msra.mxu0 0.0
        %611 = vmatprep.subr.mxu0 0.0
        %612 = vmatpush1.msra.mxu0 0.0
        %613 = vmatprep.subr.mxu0 0.0
        %614 = vmatpush1.msra.mxu0 0.0
        %615 = vmatprep.subr.mxu0 0.0
        %616 = vmatpush1.msra.mxu0 0.0
        %617 = vmatprep.subr.mxu0 0.0
        %618 = vmatpush1.msra.mxu0 0.0
        %619 = vmatprep.subr.mxu0 0.0
        %620 = vmatpush1.msra.mxu0 0.0
        %621 = vmatprep.subr.mxu0 %v589
        %622 = vmatpush1.msra.mxu0 %v587
        %623 = vmatprep.subr.mxu0 0.0
        %624 = vmatpush2.msra.mxu0 0.0
        %625 = vmatprep.subr.mxu0 0.0
        %626 = vmatpush2.msra.mxu0 0.0
        %627 = vmatprep.subr.mxu0 0.0
        %628 = vmatpush2.msra.mxu0 0.0
        %629 = vmatprep.subr.mxu0 0.0
        %630 = vmatpush2.msra.mxu0 0.0
        %631 = vmatprep.subr.mxu0 0.0
        %632 = vmatpush2.msra.mxu0 0.0
        %633 = vmatprep.subr.mxu0 0.0
        %634 = vmatpush2.msra.mxu0 0.0
        %635 = vmatprep.subr.mxu0 0.0
        %636 = vmatpush2.msra.mxu0 0.0
        %637 = vmatprep.subr.mxu0 0.0
        %638 = vmatpush2.msra.mxu0 0.0
        %639 = vmatprep.subr.mxu0 0.0
        %640 = vmatpush2.msra.mxu0 0.0
        %641 = vmatprep.subr.mxu0 0.0
        %642 = vmatpush2.msra.mxu0 0.0
        %643 = vmatprep.subr.mxu0 0.0
        %644 = vmatpush2.msra.mxu0 0.0
        %645 = vmatprep.subr.mxu0 0.0
        %646 = vmatpush2.msra.mxu0 0.0
        %647 = vmatprep.subr.mxu0 0.0
        %648 = vmatpush2.msra.mxu0 0.0
        %649 = vmatprep.subr.mxu0 0.0
        %650 = vmatpush2.msra.mxu0 0.0
        %651 = vmatprep.subr.mxu0 0.0
        %652 = vmatpush2.msra.mxu0 0.0
        %653 = vmatprep.subr.mxu0 0.0
        %654 = vmatpush2.msra.mxu0 0.0
        %655 = vmatprep.mubr.f32.mxu0 0.0
        %656 = vmatmul.mubr.f32.gmra.mxu0 %v585
        %v657 = vpop.f32.mrf.mxu0
        %v658 = vadd.f32 0.0, %v657
        %v659 = vpop.f32.mrf.mxu0
        %v660 = vadd.f32 0.0, %v659
        %661 = vdwg.mxu0
        %v662 = vadd.f32 %v577, %v658
        %v663 = vadd.f32 %v578, %v660
        %v664 = vld [vmem:[#allocation2 + $0x4] sm:$0xff]
        %v665 = vld [vmem:[#allocation2 + $0xc] sm:$0xf]
        %v668 = vcombine.high %v664, %v664
        %669 = vrot.lane.b32.xlu0 %v664, 127
        %v670 = vpop.permute.xlu0 %669
        %671 = vrot.lane.b32.xlu0 %v668, 127
        %v672 = vpop.permute.xlu0 %671
        %673 = vrot.lane.b32.xlu0 %v665, 127
        %v674 = vpop.permute.xlu0 %673
        %vm675 = vcmask 1039360
        %v676 = vsel %vm675, %v670, %v672
        %v677 = vsel %vm675, %v672, %v674
        %v680 = vsel %vm375, %v676, 0.0
        %v681 = vsel %vm376, %v677, 0.0
        %s682 = scalar_lea.vmem %s1, 40
        %v683 = vld [vmem:[%s682] sm:$0xff]
        %v685 = vsel %vm211, %v683, 0
        %v688 = vsel %vm215, %v680, 0
        %v691 = vsel %vm215, %v681, 0
        %693 = vmatprep.subr.mxu0 0.0
        %694 = vmatpush1.msra.mxu0 0.0
        %695 = vmatprep.subr.mxu0 0.0
        %696 = vmatpush1.msra.mxu0 0.0
        %697 = vmatprep.subr.mxu0 0.0
        %698 = vmatpush1.msra.mxu0 0.0
        %699 = vmatprep.subr.mxu0 0.0
        %700 = vmatpush1.msra.mxu0 0.0
        %701 = vmatprep.subr.mxu0 0.0
        %702 = vmatpush1.msra.mxu0 0.0
        %703 = vmatprep.subr.mxu0 0.0
        %704 = vmatpush1.msra.mxu0 0.0
        %705 = vmatprep.subr.mxu0 0.0
        %706 = vmatpush1.msra.mxu0 0.0
        %707 = vmatprep.subr.mxu0 0.0
        %708 = vmatpush1.msra.mxu0 0.0
        %709 = vmatprep.subr.mxu0 0.0
        %710 = vmatpush1.msra.mxu0 0.0
        %711 = vmatprep.subr.mxu0 0.0
        %712 = vmatpush1.msra.mxu0 0.0
        %713 = vmatprep.subr.mxu0 0.0
        %714 = vmatpush1.msra.mxu0 0.0
        %715 = vmatprep.subr.mxu0 0.0
        %716 = vmatpush1.msra.mxu0 0.0
        %717 = vmatprep.subr.mxu0 0.0
        %718 = vmatpush1.msra.mxu0 0.0
        %719 = vmatprep.subr.mxu0 0.0
        %720 = vmatpush1.msra.mxu0 0.0
        %721 = vmatprep.subr.mxu0 0.0
        %722 = vmatpush1.msra.mxu0 0.0
        %723 = vmatprep.subr.mxu0 %v691
        %724 = vmatpush1.msra.mxu0 %v688
        %725 = vmatprep.subr.mxu0 0.0
        %726 = vmatpush2.msra.mxu0 0.0
        %727 = vmatprep.subr.mxu0 0.0
        %728 = vmatpush2.msra.mxu0 0.0
        %729 = vmatprep.subr.mxu0 0.0
        %730 = vmatpush2.msra.mxu0 0.0
        %731 = vmatprep.subr.mxu0 0.0
        %732 = vmatpush2.msra.mxu0 0.0
        %733 = vmatprep.subr.mxu0 0.0
        %734 = vmatpush2.msra.mxu0 0.0
        %735 = vmatprep.subr.mxu0 0.0
        %736 = vmatpush2.msra.mxu0 0.0
        %737 = vmatprep.subr.mxu0 0.0
        %738 = vmatpush2.msra.mxu0 0.0
        %739 = vmatprep.subr.mxu0 0.0
        %740 = vmatpush2.msra.mxu0 0.0
        %741 = vmatprep.subr.mxu0 0.0
        %742 = vmatpush2.msra.mxu0 0.0
        %743 = vmatprep.subr.mxu0 0.0
        %744 = vmatpush2.msra.mxu0 0.0
        %745 = vmatprep.subr.mxu0 0.0
        %746 = vmatpush2.msra.mxu0 0.0
        %747 = vmatprep.subr.mxu0 0.0
        %748 = vmatpush2.msra.mxu0 0.0
        %749 = vmatprep.subr.mxu0 0.0
        %750 = vmatpush2.msra.mxu0 0.0
        %751 = vmatprep.subr.mxu0 0.0
        %752 = vmatpush2.msra.mxu0 0.0
        %753 = vmatprep.subr.mxu0 0.0
        %754 = vmatpush2.msra.mxu0 0.0
        %755 = vmatprep.subr.mxu0 0.0
        %756 = vmatpush2.msra.mxu0 0.0
        %757 = vmatprep.mubr.f32.mxu0 0.0
        %758 = vmatmul.mubr.f32.gmra.mxu0 %v685
        %v759 = vpop.f32.mrf.mxu0
        %v760 = vadd.f32 0.0, %v759
        %v761 = vpop.f32.mrf.mxu0
        %v762 = vadd.f32 0.0, %v761
        %763 = vdwg.mxu0
        %v764 = vadd.f32 %v662, %v760
        %v765 = vadd.f32 %v663, %v762
        %v766 = vld [vmem:[#allocation2 + $0x4] sm:$0xff]
        %v767 = vld [vmem:[#allocation2 + $0xc] sm:$0xf]
        %v770 = vcombine.high %v766, %v766
        %771 = vrot.lane.b32.xlu0 %v766, 113
        %v772 = vpop.permute.xlu0 %771
        %773 = vrot.lane.b32.xlu0 %v770, 113
        %v774 = vpop.permute.xlu0 %773
        %775 = vrot.lane.b32.xlu0 %v767, 113
        %v776 = vpop.permute.xlu0 %775
        %vm777 = vcmask 924672
        %v778 = vsel %vm777, %v772, %v774
        %v779 = vsel %vm777, %v774, %v776
        %v782 = vsel %vm181, %v778, 0.0
        %v783 = vsel %vm182, %v779, 0.0
        %s784 = scalar_lea.vmem %s1, 48
        %v785 = vld [vmem:[%s784] sm:$0xff]
        %v787 = vsel %vm211, %v785, 0
        %v790 = vsel %vm215, %v782, 0
        %v793 = vsel %vm215, %v783, 0
        %795 = vmatprep.subr.mxu0 0.0
        %796 = vmatpush1.msra.mxu0 0.0
        %797 = vmatprep.subr.mxu0 0.0
        %798 = vmatpush1.msra.mxu0 0.0
        %799 = vmatprep.subr.mxu0 0.0
        %800 = vmatpush1.msra.mxu0 0.0
        %801 = vmatprep.subr.mxu0 0.0
        %802 = vmatpush1.msra.mxu0 0.0
        %803 = vmatprep.subr.mxu0 0.0
        %804 = vmatpush1.msra.mxu0 0.0
        %805 = vmatprep.subr.mxu0 0.0
        %806 = vmatpush1.msra.mxu0 0.0
        %807 = vmatprep.subr.mxu0 0.0
        %808 = vmatpush1.msra.mxu0 0.0
        %809 = vmatprep.subr.mxu0 0.0
        %810 = vmatpush1.msra.mxu0 0.0
        %811 = vmatprep.subr.mxu0 0.0
        %812 = vmatpush1.msra.mxu0 0.0
        %813 = vmatprep.subr.mxu0 0.0
        %814 = vmatpush1.msra.mxu0 0.0
        %815 = vmatprep.subr.mxu0 0.0
        %816 = vmatpush1.msra.mxu0 0.0
        %817 = vmatprep.subr.mxu0 0.0
        %818 = vmatpush1.msra.mxu0 0.0
        %819 = vmatprep.subr.mxu0 0.0
        %820 = vmatpush1.msra.mxu0 0.0
        %821 = vmatprep.subr.mxu0 0.0
        %822 = vmatpush1.msra.mxu0 0.0
        %823 = vmatprep.subr.mxu0 0.0
        %824 = vmatpush1.msra.mxu0 0.0
        %825 = vmatprep.subr.mxu0 %v793
        %826 = vmatpush1.msra.mxu0 %v790
        %827 = vmatprep.subr.mxu0 0.0
        %828 = vmatpush2.msra.mxu0 0.0
        %829 = vmatprep.subr.mxu0 0.0
        %830 = vmatpush2.msra.mxu0 0.0
        %831 = vmatprep.subr.mxu0 0.0
        %832 = vmatpush2.msra.mxu0 0.0
        %833 = vmatprep.subr.mxu0 0.0
        %834 = vmatpush2.msra.mxu0 0.0
        %835 = vmatprep.subr.mxu0 0.0
        %836 = vmatpush2.msra.mxu0 0.0
        %837 = vmatprep.subr.mxu0 0.0
        %838 = vmatpush2.msra.mxu0 0.0
        %839 = vmatprep.subr.mxu0 0.0
        %840 = vmatpush2.msra.mxu0 0.0
        %841 = vmatprep.subr.mxu0 0.0
        %842 = vmatpush2.msra.mxu0 0.0
        %843 = vmatprep.subr.mxu0 0.0
        %844 = vmatpush2.msra.mxu0 0.0
        %845 = vmatprep.subr.mxu0 0.0
        %846 = vmatpush2.msra.mxu0 0.0
        %847 = vmatprep.subr.mxu0 0.0
        %848 = vmatpush2.msra.mxu0 0.0
        %849 = vmatprep.subr.mxu0 0.0
        %850 = vmatpush2.msra.mxu0 0.0
        %851 = vmatprep.subr.mxu0 0.0
        %852 = vmatpush2.msra.mxu0 0.0
        %853 = vmatprep.subr.mxu0 0.0
        %854 = vmatpush2.msra.mxu0 0.0
        %855 = vmatprep.subr.mxu0 0.0
        %856 = vmatpush2.msra.mxu0 0.0
        %857 = vmatprep.subr.mxu0 0.0
        %858 = vmatpush2.msra.mxu0 0.0
        %859 = vmatprep.mubr.f32.mxu0 0.0
        %860 = vmatmul.mubr.f32.gmra.mxu0 %v787
        %v861 = vpop.f32.mrf.mxu0
        %v862 = vadd.f32 0.0, %v861
        %v863 = vpop.f32.mrf.mxu0
        %v864 = vadd.f32 0.0, %v863
        %865 = vdwg.mxu0
        %v866 = vadd.f32 %v764, %v862
        %v867 = vadd.f32 %v765, %v864
        %v868 = vld [vmem:[#allocation2 + $0x4] sm:$0xff]
        %v869 = vld [vmem:[#allocation2 + $0xc] sm:$0xf]
        %s870 = scalar_lea.vmem %s1, 56
        %v871 = vld [vmem:[%s870] sm:$0xff]
        %v874 = vcombine.high %v868, %v868
        %875 = vrot.lane.b32.xlu0 %v868, 112
        %v876 = vpop.permute.xlu0 %875
        %877 = vrot.lane.b32.xlu0 %v874, 112
        %v878 = vpop.permute.xlu0 %877
        %879 = vrot.lane.b32.xlu0 %v869, 112
        %v880 = vpop.permute.xlu0 %879
        %vm881 = vcmask 916480
        %v882 = vsel %vm881, %v876, %v878
        %v883 = vsel %vm881, %v878, %v880
        %v885 = vsel %vm211, %v871, 0
        %v887 = vsel %vm215, %v882, 0
        %v889 = vsel %vm215, %v883, 0
        %891 = vmatprep.subr.mxu0 0.0
        %892 = vmatpush1.msra.mxu0 0.0
        %893 = vmatprep.subr.mxu0 0.0
        %894 = vmatpush1.msra.mxu0 0.0
        %895 = vmatprep.subr.mxu0 0.0
        %896 = vmatpush1.msra.mxu0 0.0
        %897 = vmatprep.subr.mxu0 0.0
        %898 = vmatpush1.msra.mxu0 0.0
        %899 = vmatprep.subr.mxu0 0.0
        %900 = vmatpush1.msra.mxu0 0.0
        %901 = vmatprep.subr.mxu0 0.0
        %902 = vmatpush1.msra.mxu0 0.0
        %903 = vmatprep.subr.mxu0 0.0
        %904 = vmatpush1.msra.mxu0 0.0
        %905 = vmatprep.subr.mxu0 0.0
        %906 = vmatpush1.msra.mxu0 0.0
        %907 = vmatprep.subr.mxu0 0.0
        %908 = vmatpush1.msra.mxu0 0.0
        %909 = vmatprep.subr.mxu0 0.0
        %910 = vmatpush1.msra.mxu0 0.0
        %911 = vmatprep.subr.mxu0 0.0
        %912 = vmatpush1.msra.mxu0 0.0
        %913 = vmatprep.subr.mxu0 0.0
        %914 = vmatpush1.msra.mxu0 0.0
        %915 = vmatprep.subr.mxu0 0.0
        %916 = vmatpush1.msra.mxu0 0.0
        %917 = vmatprep.subr.mxu0 0.0
        %918 = vmatpush1.msra.mxu0 0.0
        %919 = vmatprep.subr.mxu0 0.0
        %920 = vmatpush1.msra.mxu0 0.0
        %921 = vmatprep.subr.mxu0 %v889
        %922 = vmatpush1.msra.mxu0 %v887
        %923 = vmatprep.subr.mxu0 0.0
        %924 = vmatpush2.msra.mxu0 0.0
        %925 = vmatprep.subr.mxu0 0.0
        %926 = vmatpush2.msra.mxu0 0.0
        %927 = vmatprep.subr.mxu0 0.0
        %928 = vmatpush2.msra.mxu0 0.0
        %929 = vmatprep.subr.mxu0 0.0
        %930 = vmatpush2.msra.mxu0 0.0
        %931 = vmatprep.subr.mxu0 0.0
        %932 = vmatpush2.msra.mxu0 0.0
        %933 = vmatprep.subr.mxu0 0.0
        %934 = vmatpush2.msra.mxu0 0.0
        %935 = vmatprep.subr.mxu0 0.0
        %936 = vmatpush2.msra.mxu0 0.0
        %937 = vmatprep.subr.mxu0 0.0
        %938 = vmatpush2.msra.mxu0 0.0
        %939 = vmatprep.subr.mxu0 0.0
        %940 = vmatpush2.msra.mxu0 0.0
        %941 = vmatprep.subr.mxu0 0.0
        %942 = vmatpush2.msra.mxu0 0.0
        %943 = vmatprep.subr.mxu0 0.0
        %944 = vmatpush2.msra.mxu0 0.0
        %945 = vmatprep.subr.mxu0 0.0
        %946 = vmatpush2.msra.mxu0 0.0
        %947 = vmatprep.subr.mxu0 0.0
        %948 = vmatpush2.msra.mxu0 0.0
        %949 = vmatprep.subr.mxu0 0.0
        %950 = vmatpush2.msra.mxu0 0.0
        %951 = vmatprep.subr.mxu0 0.0
        %952 = vmatpush2.msra.mxu0 0.0
        %953 = vmatprep.subr.mxu0 0.0
        %954 = vmatpush2.msra.mxu0 0.0
        %955 = vmatprep.mubr.f32.mxu0 0.0
        %956 = vmatmul.mubr.f32.gmra.mxu0 %v885
        %v957 = vpop.f32.mrf.mxu0
        %v958 = vadd.f32 0.0, %v957
        %v959 = vpop.f32.mrf.mxu0
        %v960 = vadd.f32 0.0, %v959
        %961 = vdwg.mxu0
        %v962 = vadd.f32 %v866, %v958
        %v963 = vadd.f32 %v867, %v960
        %v964 = vld [vmem:[#allocation2 + $0x4] sm:$0xff]
        %v965 = vld [vmem:[#allocation2 + $0xc] sm:$0xf]
        %v968 = vcombine.high %v964, %v964
        %969 = vrot.lane.b32.xlu0 %v964, 111
        %v970 = vpop.permute.xlu0 %969
        %971 = vrot.lane.b32.xlu0 %v968, 111
        %v972 = vpop.permute.xlu0 %971
        %973 = vrot.lane.b32.xlu0 %v965, 111
        %v974 = vpop.permute.xlu0 %973
        %vm975 = vcmask 908288
        %v976 = vsel %vm975, %v970, %v972
        %v977 = vsel %vm975, %v972, %v974
        %v980 = vsel %vm375, %v976, 0.0
        %v981 = vsel %vm376, %v977, 0.0
        %s982 = scalar_lea.vmem %s1, 64
        %v983 = vld [vmem:[%s982] sm:$0xff]
        %v985 = vsel %vm211, %v983, 0
        %v988 = vsel %vm215, %v980, 0
        %v991 = vsel %vm215, %v981, 0
        %993 = vmatprep.subr.mxu0 0.0
        %994 = vmatpush1.msra.mxu0 0.0
        %995 = vmatprep.subr.mxu0 0.0
        %996 = vmatpush1.msra.mxu0 0.0
        %997 = vmatprep.subr.mxu0 0.0
        %998 = vmatpush1.msra.mxu0 0.0
        %999 = vmatprep.subr.mxu0 0.0
        %1000 = vmatpush1.msra.mxu0 0.0
        %1001 = vmatprep.subr.mxu0 0.0
        %1002 = vmatpush1.msra.mxu0 0.0
        %1003 = vmatprep.subr.mxu0 0.0
        %1004 = vmatpush1.msra.mxu0 0.0
        %1005 = vmatprep.subr.mxu0 0.0
        %1006 = vmatpush1.msra.mxu0 0.0
        %1007 = vmatprep.subr.mxu0 0.0
        %1008 = vmatpush1.msra.mxu0 0.0
        %1009 = vmatprep.subr.mxu0 0.0
        %1010 = vmatpush1.msra.mxu0 0.0
        %1011 = vmatprep.subr.mxu0 0.0
        %1012 = vmatpush1.msra.mxu0 0.0
        %1013 = vmatprep.subr.mxu0 0.0
        %1014 = vmatpush1.msra.mxu0 0.0
        %1015 = vmatprep.subr.mxu0 0.0
        %1016 = vmatpush1.msra.mxu0 0.0
        %1017 = vmatprep.subr.mxu0 0.0
        %1018 = vmatpush1.msra.mxu0 0.0
        %1019 = vmatprep.subr.mxu0 0.0
        %1020 = vmatpush1.msra.mxu0 0.0
        %1021 = vmatprep.subr.mxu0 0.0
        %1022 = vmatpush1.msra.mxu0 0.0
        %1023 = vmatprep.subr.mxu0 %v991
        %1024 = vmatpush1.msra.mxu0 %v988
        %1025 = vmatprep.subr.mxu0 0.0
        %1026 = vmatpush2.msra.mxu0 0.0
        %1027 = vmatprep.subr.mxu0 0.0
        %1028 = vmatpush2.msra.mxu0 0.0
        %1029 = vmatprep.subr.mxu0 0.0
        %1030 = vmatpush2.msra.mxu0 0.0
        %1031 = vmatprep.subr.mxu0 0.0
        %1032 = vmatpush2.msra.mxu0 0.0
        %1033 = vmatprep.subr.mxu0 0.0
        %1034 = vmatpush2.msra.mxu0 0.0
        %1035 = vmatprep.subr.mxu0 0.0
        %1036 = vmatpush2.msra.mxu0 0.0
        %1037 = vmatprep.subr.mxu0 0.0
        %1038 = vmatpush2.msra.mxu0 0.0
        %1039 = vmatprep.subr.mxu0 0.0
        %1040 = vmatpush2.msra.mxu0 0.0
        %1041 = vmatprep.subr.mxu0 0.0
        %1042 = vmatpush2.msra.mxu0 0.0
        %1043 = vmatprep.subr.mxu0 0.0
        %1044 = vmatpush2.msra.mxu0 0.0
        %1045 = vmatprep.subr.mxu0 0.0
        %1046 = vmatpush2.msra.mxu0 0.0
        %1047 = vmatprep.subr.mxu0 0.0
        %1048 = vmatpush2.msra.mxu0 0.0
        %1049 = vmatprep.subr.mxu0 0.0
        %1050 = vmatpush2.msra.mxu0 0.0
        %1051 = vmatprep.subr.mxu0 0.0
        %1052 = vmatpush2.msra.mxu0 0.0
        %1053 = vmatprep.subr.mxu0 0.0
        %1054 = vmatpush2.msra.mxu0 0.0
        %1055 = vmatprep.subr.mxu0 0.0
        %1056 = vmatpush2.msra.mxu0 0.0
        %1057 = vmatprep.mubr.f32.mxu0 0.0
        %1058 = vmatmul.mubr.f32.gmra.mxu0 %v985
        %v1059 = vpop.f32.mrf.mxu0
        %v1060 = vadd.f32 0.0, %v1059
        %v1061 = vpop.f32.mrf.mxu0
        %v1062 = vadd.f32 0.0, %v1061
        %1063 = vdwg.mxu0
        %v1064 = vadd.f32 %v962, %v1060
        %v1065 = vadd.f32 %v963, %v1062
        %1066 = vst [vmem:[%s136] sm:$0xff] %v1064
        %1067 = vst [vmem:[%s136 + $0x8] sm:$0xff] %v1065
        %s1068 = sand.u32 %s71, 1
        %s1069 = scalar_lea.sflag [#allocation4], %s1068
        %s1070 = sand.u32 %s71, 1
        %s1071 = smul.addr %s1070, 16
        %s1072 = scalar_lea.vmem [#allocation3], %s1071
        // Predicated region
        $region29: #{tpu_custom_call.1} parent=27 // pred_check
          %p1073 = pneg %p81
        $region30: #{tpu_custom_call.1} parent=27 // pred_check_branch
          %1075 = sbr.rel (%p1073) target = $region32
        $region31: #{tpu_custom_call.1} parent=27 // pred_region
          %s1077 = ssub.s32 256, 256
          %1078 = vsyncadd %s1069, %s1077
          %s1079 = smul.addr %s16, 2
          %s1080 = smul.addr %s1079, 128
          %s1081 = scalar_lea.hbm %s2, %s1080
          %s1083 = sshll.u32 %s1072, 4
          %s1084 = int_to_ptr.vmem [resolvable:$true] %s1083
          %1086 = dma.vmem_to_hbm [thread:$0]  %s1084, 256, %s1081, %s1069
        $region32: #{tpu_custom_call.1} parent=27 // pred_fallthru
          _
      $region28: #{tpu_custom_call.1} parent=5 // pred_fallthru
        _
      %p1087 = scmp.le.s32.totalorder 2, %s11
      // Predicated region
      $region33: #{tpu_custom_call.1} parent=5 // pred_check
        %p1088 = pneg %p1087
      $region34: #{tpu_custom_call.1} parent=5 // pred_check_branch
        %1090 = sbr.rel (%p1088) target = $region36
      $region35: #{tpu_custom_call.1} parent=5 // pred_region
        %s1091 = ssub.s32 %s11, 2
        // Predicated region
        $region37: #{tpu_custom_call.1} parent=35 // pred_check
          %p1092 = pneg %p87
        $region38: #{tpu_custom_call.1} parent=35 // pred_check_branch
          %1094 = sbr.rel (%p1092) target = $region40
        $region39: #{tpu_custom_call.1} parent=35 // pred_region
          %s1095 = sand.u32 %s72, 1
          %s1096 = scalar_lea.sflag [#allocation4], %s1095
          %s1097 = sand.u32 %s72, 1
          %s1098 = smul.addr %s1097, 16
          %s1099 = scalar_lea.vmem [#allocation3], %s1098
          %1100 = dma.done %s1096, 256
        $region40: #{tpu_custom_call.1} parent=35 // pred_fallthru
          _
      $region36: #{tpu_custom_call.1} parent=5 // pred_fallthru
        _
    $region6: #{tpu_custom_call.1} parent=1 // loop_footer
      %s15 = sadd.s32 1, %s11
    $region7: #{tpu_custom_call.1} parent=1 // loop_footer_branch
      %10 = sbr.rel target = $region3
    $region8: #{tpu_custom_call.1} parent=1 // loop_exit
      _
    %1101 = vsyncpa [#allocation4], 1
    %s1102 = scalar_lea.sflag [#allocation4], 1
    %1103 = vsyncpa %s1102, 1

</llo_original>
